<compile_context>
chip_gen: v6e
topology: v6e:2x2x1
jax: 0.10.0
libtpu: 0.0.40
codegen_flags: <defaults>
</compile_context>

<pallas_src>
import jax
import jax.numpy as jnp
import numpy as np
from jax.experimental import pallas as pl
from jax.experimental.pallas import tpu as pltpu

KSIZE = 3   # 3x3 convs, padding=1
PAD0 = 8    # sublane-aligned start row of the intermediate inside its scratch


def _skip_layer_kernel(xcat_ref, xid_ref, w1b_ref, w2b_ref, b1_ref, b2_ref,
                       out_ref, h1p_ref):
    # xcat_ref : (N, H, 3*W*Cin)     dy-concatenated, H-padded input rows
    # xid_ref  : (N, H, W*Cin)       unpadded input rows (residual identity)
    # w1b_ref  : (3*W*Cin, W*Cout)   conv1 band matrix (BN1 scale folded in)
    # w2b_ref  : (3, W*Cout, W*Cout) conv2 band matrices, one per dy tap
    # b1_ref   : (1, W*Cout)         folded BN1 bias (tiled over x)
    # b2_ref   : (1, W*Cout)         folded BN2 bias (tiled over x)
    # out_ref  : (N, H, W*Cout)
    # h1p_ref  : VMEM scratch (N, PAD0+H+1, W*Cout) holding the H-padded h1
    N, H, WC = out_ref.shape
    K1 = w1b_ref.shape[0]

    # ---- conv1 + BN1 + ReLU : single matmul, K = 3*W*Cin ----
    xcat = xcat_ref[...].reshape(N * H, K1)
    h1 = jnp.dot(xcat, w1b_ref[...], preferred_element_type=jnp.float32)
    h1 = jnp.maximum(h1 + b1_ref[...], 0.0)                 # (N*H, W*Cout)

    # ---- stage h1 with one zero row above/below each image (for the dy taps);
    #      interior store is sublane-aligned, only the border rows get zeroed --
    zrow = jnp.zeros((N, 1, WC), jnp.float32)
    h1p_ref[:, PAD0 - 1:PAD0, :] = zrow
    h1p_ref[:, PAD0 + H:PAD0 + H + 1, :] = zrow
    h1p_ref[:, PAD0:PAD0 + H, :] = h1.reshape(N, H, WC)

    # ---- conv2 + BN2 : 3 banded matmuls (one per dy tap), K = W*Cout ----
    acc = None
    for dy in range(KSIZE):
        p = h1p_ref[:, PAD0 - 1 + dy:PAD0 - 1 + dy + H, :].reshape(N * H, WC)
        d = jnp.dot(p, w2b_ref[dy], preferred_element_type=jnp.float32)
        acc = d if acc is None else acc + d
    h2 = acc + b2_ref[...]

    # ---- residual add + final ReLU ----
    out = jnp.maximum(h2 + xid_ref[...].reshape(N * H, WC), 0.0)
    out_ref[...] = out.reshape(N, H, WC)


def _conv_band(w_hwio, W):
    """Toeplitz band matrices: (3, 3, Cin, Cout) -> (3, W*Cin, W*Cout).

    band[dy, wi*Cin+ci, x*Cout+co] = w[dy, dx, ci, co]  with  wi = x + dx - 1,
    and zero where x+dx-1 falls outside [0, W): the conv's zero padding along W
    is folded into the weight structure (no physical W padding needed).
    """
    Kh, Kw, Cin, Cout = w_hwio.shape
    wi = jnp.arange(W)[None, :, None]
    xx = jnp.arange(W)[None, None, :]
    dx = jnp.arange(Kw)[:, None, None]
    sel = (wi == xx + dx - 1).astype(jnp.float32)           # (Kw, W, W)
    band = jnp.einsum('awx,yaco->ywcxo', sel, w_hwio.astype(jnp.float32))
    return band.reshape(Kh, W * Cin, W * Cout)


def skip_layer_pallas(x_nchw, w1_hwio, w2_hwio, scale1, bias1, scale2, bias2):
    """x_nchw: (N, C, H, W) float32. Returns (N, C, H, W) float32."""
    x = jnp.transpose(x_nchw, (0, 2, 3, 1)).astype(jnp.float32)   # -> NHWC
    N, H, W, Cin = x.shape
    Cout = w1_hwio.shape[-1]
    assert Cin == Cout, "stride=1 skip path requires in_ch == out_ch"
    WC = W * Cout

    # Fold the BN scales into the band weights; only the bias stays in-kernel.
    s1 = jnp.tile(scale1.astype(jnp.float32), W)                  # (W*Cout,)
    s2 = jnp.tile(scale2.astype(jnp.float32), W)
    w1b = (_conv_band(w1_hwio, W) * s1[None, None, :]).reshape(KSIZE * W * Cin, WC)
    w2b = _conv_band(w2_hwio, W) * s2[None, None, :]              # (3, WC, WC)
    b1r = jnp.tile(bias1.astype(jnp.float32), W).reshape(1, WC)
    b2r = jnp.tile(bias2.astype(jnp.float32), W).reshape(1, WC)

    # Row-flattened activations: lane axis = W*C (64) instead of C (4).
    x_rows = x.reshape(N, H, W * Cin)
    xpadH = jnp.pad(x_rows, ((0, 0), (1, 1), (0, 0)))             # H-pad only
    xcat = jnp.concatenate([xpadH[:, dy:dy + H, :] for dy in range(KSIZE)],
                           axis=-1)                               # (N, H, 3*W*Cin)

    out_rows = pl.pallas_call(
        _skip_layer_kernel,
        out_shape=jax.ShapeDtypeStruct((N, H, WC), jnp.float32),
        grid_spec=pltpu.PrefetchScalarGridSpec(
            num_scalar_prefetch=0,
            grid=(1,),   # whole (tiny) batch in one step; batch packed into M
            in_specs=[
                pl.BlockSpec((N, H, KSIZE * W * Cin), lambda i: (0, 0, 0)),
                pl.BlockSpec((N, H, W * Cin), lambda i: (0, 0, 0)),
                pl.BlockSpec((KSIZE * W * Cin, WC), lambda i: (0, 0)),
                pl.BlockSpec((KSIZE, WC, WC), lambda i: (0, 0, 0)),
                pl.BlockSpec((1, WC), lambda i: (0, 0)),
                pl.BlockSpec((1, WC), lambda i: (0, 0)),
            ],
            out_specs=pl.BlockSpec((N, H, WC), lambda i: (0, 0, 0)),
            scratch_shapes=[pltpu.VMEM((N, PAD0 + H + 1, WC), jnp.float32)],
        ),
        compiler_params=pltpu.CompilerParams(
            dimension_semantics=("arbitrary",)),
    )(xcat, x_rows, w1b, w2b, b1r, b2r)

    out = out_rows.reshape(N, H, W, Cout)
    return jnp.transpose(out, (0, 3, 1, 2))                       # -> NCHW


def _ref_forward(x_nchw, w1_hwio, w2_hwio, s1, b1, s2, b2):
    """Pure-JAX reference (NHWC conv via lax), for correctness check."""
    x = jnp.transpose(x_nchw, (0, 2, 3, 1))

    def conv(v, w):
        return jax.lax.conv_general_dilated(
            v, w, window_strides=(1, 1), padding=((1, 1), (1, 1)),
            dimension_numbers=("NHWC", "HWIO", "NHWC"),
            precision=jax.lax.Precision.HIGHEST)

    h1 = jnp.maximum(conv(x, w1_hwio) * s1 + b1, 0.0)
    h2 = conv(h1, w2_hwio) * s2 + b2
    out = jnp.maximum(h2 + x, 0.0)
    return jnp.transpose(out, (0, 3, 1, 2))


if __name__ == "__main__":
    # SkipLayer(in_ch=4, out_ch=4, kernel_size=3, stride_first_conv=1)
    N, C, H, W = 2, 4, 16, 16
    key = jax.random.PRNGKey(0)
    kx, kw1, kw2, kg1, kb1, km1, kv1, kg2, kb2, km2, kv2 = jax.random.split(key, 11)

    x = jax.random.normal(kx, (N, C, H, W), jnp.float32)

    # Conv weights (PyTorch OIHW (out,in,3,3)) -> stored here directly as HWIO.
    fan_in = C * KSIZE * KSIZE
    w1 = jax.random.normal(kw1, (KSIZE, KSIZE, C, C), jnp.float32) / np.sqrt(fan_in)
    w2 = jax.random.normal(kw2, (KSIZE, KSIZE, C, C), jnp.float32) / np.sqrt(fan_in)

    # BatchNorm (inference mode): fold gamma/beta/running stats into scale+bias.
    eps = 1e-5
    g1 = 1.0 + 0.1 * jax.random.normal(kg1, (C,), jnp.float32)
    be1 = 0.1 * jax.random.normal(kb1, (C,), jnp.float32)
    m1 = 0.1 * jax.random.normal(km1, (C,), jnp.float32)
    v1 = 1.0 + 0.1 * jax.random.uniform(kv1, (C,), jnp.float32)
    g2 = 1.0 + 0.1 * jax.random.normal(kg2, (C,), jnp.float32)
    be2 = 0.1 * jax.random.normal(kb2, (C,), jnp.float32)
    m2 = 0.1 * jax.random.normal(km2, (C,), jnp.float32)
    v2 = 1.0 + 0.1 * jax.random.uniform(kv2, (C,), jnp.float32)

    scale1 = g1 / jnp.sqrt(v1 + eps)
    bias1 = be1 - m1 * scale1
    scale2 = g2 / jnp.sqrt(v2 + eps)
    bias2 = be2 - m2 * scale2

    out = skip_layer_pallas(x, w1, w2, scale1, bias1, scale2, bias2)
    out = jax.block_until_ready(out)

    ref = _ref_forward(x, w1, w2, scale1, bias1, scale2, bias2)
    np.testing.assert_allclose(np.asarray(out), np.asarray(ref),
                               rtol=1e-3, atol=1e-3)
    print("KERNEL_OK")
</pallas_src>

<mosaic_0001>
module attributes {stable_mosaic.version = 11 : i64} {
  func.func @_skip_layer_kernel(%arg0: i32, %arg1: memref<2x16x192xf32, #tpu.memory_space<vmem>>, %arg2: memref<2x16x64xf32, #tpu.memory_space<vmem>>, %arg3: memref<192x64xf32, #tpu.memory_space<vmem>>, %arg4: memref<3x64x64xf32, #tpu.memory_space<vmem>>, %arg5: memref<1x64xf32, #tpu.memory_space<vmem>>, %arg6: memref<1x64xf32, #tpu.memory_space<vmem>>, %arg7: memref<2x16x64xf32, #tpu.memory_space<vmem>>, %arg8: memref<2x25x64xf32, #tpu.memory_space<vmem>>) attributes {dimension_semantics = [#tpu.dimension_semantics<arbitrary>], iteration_bounds = array<i64: 1>, scalar_prefetch = 0 : i64, scratch_operands = 1 : i64, tpu.core_type = #tpu.core_type<tc>, window_params = [{pipeline_mode = #tpu.pipeline_mode<synchronous>, transform_indices = @transform_0, window_bounds = array<i64: 2, 16, 192>}, {pipeline_mode = #tpu.pipeline_mode<synchronous>, transform_indices = @transform_1, window_bounds = array<i64: 2, 16, 64>}, {pipeline_mode = #tpu.pipeline_mode<synchronous>, transform_indices = @transform_2, window_bounds = array<i64: 192, 64>}, {pipeline_mode = #tpu.pipeline_mode<synchronous>, transform_indices = @transform_3, window_bounds = array<i64: 3, 64, 64>}, {pipeline_mode = #tpu.pipeline_mode<synchronous>, transform_indices = @transform_4, window_bounds = array<i64: 1, 64>}, {pipeline_mode = #tpu.pipeline_mode<synchronous>, transform_indices = @transform_5, window_bounds = array<i64: 1, 64>}, {pipeline_mode = #tpu.pipeline_mode<synchronous>, transform_indices = @transform_6, window_bounds = array<i64: 2, 16, 64>}]} {
    %c0 = arith.constant 0 : index
    %c0_0 = arith.constant 0 : index
    %c0_1 = arith.constant 0 : index
    %0 = vector.load %arg1[%c0, %c0_0, %c0_1] : memref<2x16x192xf32, #tpu.memory_space<vmem>>, vector<2x16x192xf32>
    %1 = vector.shape_cast %0 : vector<2x16x192xf32> to vector<32x192xf32>
    %c0_2 = arith.constant 0 : index
    %c0_3 = arith.constant 0 : index
    %2 = vector.load %arg3[%c0_2, %c0_3] : memref<192x64xf32, #tpu.memory_space<vmem>>, vector<192x64xf32>
    %cst = arith.constant dense<0.000000e+00> : vector<32x64xf32>
    %3 = tpu.matmul %1, %2, %cst {dimension_numbers = #tpu.dot_dimension_numbers<[1], [0], [0], [1], [0, 0, 1, 1], [], []>} : vector<32x192xf32>, vector<192x64xf32>, vector<32x64xf32> -> vector<32x64xf32>
    %c0_4 = arith.constant 0 : index
    %c0_5 = arith.constant 0 : index
    %4 = vector.load %arg5[%c0_4, %c0_5] : memref<1x64xf32, #tpu.memory_space<vmem>>, vector<1x64xf32>
    %5 = vector.broadcast %4 : vector<1x64xf32> to vector<32x64xf32>
    %6 = arith.addf %3, %5 : vector<32x64xf32>
    %cst_6 = arith.constant 0.000000e+00 : f32
    %7 = vector.broadcast %cst_6 : f32 to vector<32x64xf32>
    %8 = arith.maximumf %6, %7 : vector<32x64xf32>
    %cst_7 = arith.constant 0.000000e+00 : f32
    %9 = vector.broadcast %cst_7 : f32 to vector<2x1x64xf32>
    %c0_8 = arith.constant 0 : index
    %c7 = arith.constant 7 : index
    %c0_9 = arith.constant 0 : index
    %10 = vector.load %arg8[%c0_8, %c7, %c0_9] : memref<2x25x64xf32, #tpu.memory_space<vmem>>, vector<2x1x64xf32>
    tpu.vector_store %arg8[%c0_8, %c7, %c0_9], %9 {strides = array<i32>} : memref<2x25x64xf32, #tpu.memory_space<vmem>>, vector<2x1x64xf32>,
    %c0_10 = arith.constant 0 : index
    %c24 = arith.constant 24 : index
    %c0_11 = arith.constant 0 : index
    %11 = vector.load %arg8[%c0_10, %c24, %c0_11] : memref<2x25x64xf32, #tpu.memory_space<vmem>>, vector<2x1x64xf32>
    tpu.vector_store %arg8[%c0_10, %c24, %c0_11], %9 {strides = array<i32>} : memref<2x25x64xf32, #tpu.memory_space<vmem>>, vector<2x1x64xf32>,
    %12 = vector.shape_cast %8 : vector<32x64xf32> to vector<2x16x64xf32>
    %c0_12 = arith.constant 0 : index
    %c8 = arith.constant 8 : index
    %c0_13 = arith.constant 0 : index
    %13 = vector.load %arg8[%c0_12, %c8, %c0_13] : memref<2x25x64xf32, #tpu.memory_space<vmem>>, vector<2x16x64xf32>
    tpu.vector_store %arg8[%c0_12, %c8, %c0_13], %12 {strides = array<i32>} : memref<2x25x64xf32, #tpu.memory_space<vmem>>, vector<2x16x64xf32>,
    %c0_14 = arith.constant 0 : index
    %c7_15 = arith.constant 7 : index
    %c0_16 = arith.constant 0 : index
    %14 = vector.load %arg8[%c0_14, %c7_15, %c0_16] : memref<2x25x64xf32, #tpu.memory_space<vmem>>, vector<2x16x64xf32>
    %15 = vector.shape_cast %14 : vector<2x16x64xf32> to vector<32x64xf32>
    %c0_17 = arith.constant 0 : index
    %c0_18 = arith.constant 0 : index
    %c0_19 = arith.constant 0 : index
    %16 = vector.load %arg4[%c0_17, %c0_18, %c0_19] : memref<3x64x64xf32, #tpu.memory_space<vmem>>, vector<1x64x64xf32>
    %17 = vector.shape_cast %16 : vector<1x64x64xf32> to vector<64x64xf32>
    %cst_20 = arith.constant dense<0.000000e+00> : vector<32x64xf32>
    %18 = tpu.matmul %15, %17, %cst_20 {dimension_numbers = #tpu.dot_dimension_numbers<[1], [0], [0], [1], [0, 0, 1, 1], [], []>} : vector<32x64xf32>, vector<64x64xf32>, vector<32x64xf32> -> vector<32x64xf32>
    %c0_21 = arith.constant 0 : index
    %c8_22 = arith.constant 8 : index
    %c0_23 = arith.constant 0 : index
    %19 = vector.load %arg8[%c0_21, %c8_22, %c0_23] : memref<2x25x64xf32, #tpu.memory_space<vmem>>, vector<2x16x64xf32>
    %20 = vector.shape_cast %19 : vector<2x16x64xf32> to vector<32x64xf32>
    %c1 = arith.constant 1 : index
    %c0_24 = arith.constant 0 : index
    %c0_25 = arith.constant 0 : index
    %21 = vector.load %arg4[%c1, %c0_24, %c0_25] : memref<3x64x64xf32, #tpu.memory_space<vmem>>, vector<1x64x64xf32>
    %22 = vector.shape_cast %21 : vector<1x64x64xf32> to vector<64x64xf32>
    %cst_26 = arith.constant dense<0.000000e+00> : vector<32x64xf32>
    %23 = tpu.matmul %20, %22, %cst_26 {dimension_numbers = #tpu.dot_dimension_numbers<[1], [0], [0], [1], [0, 0, 1, 1], [], []>} : vector<32x64xf32>, vector<64x64xf32>, vector<32x64xf32> -> vector<32x64xf32>
    %24 = arith.addf %18, %23 : vector<32x64xf32>
    %c0_27 = arith.constant 0 : index
    %c9 = arith.constant 9 : index
    %c0_28 = arith.constant 0 : index
    %25 = vector.load %arg8[%c0_27, %c9, %c0_28] : memref<2x25x64xf32, #tpu.memory_space<vmem>>, vector<2x16x64xf32>
    %26 = vector.shape_cast %25 : vector<2x16x64xf32> to vector<32x64xf32>
    %c2 = arith.constant 2 : index
    %c0_29 = arith.constant 0 : index
    %c0_30 = arith.constant 0 : index
    %27 = vector.load %arg4[%c2, %c0_29, %c0_30] : memref<3x64x64xf32, #tpu.memory_space<vmem>>, vector<1x64x64xf32>
    %28 = vector.shape_cast %27 : vector<1x64x64xf32> to vector<64x64xf32>
    %cst_31 = arith.constant dense<0.000000e+00> : vector<32x64xf32>
    %29 = tpu.matmul %26, %28, %cst_31 {dimension_numbers = #tpu.dot_dimension_numbers<[1], [0], [0], [1], [0, 0, 1, 1], [], []>} : vector<32x64xf32>, vector<64x64xf32>, vector<32x64xf32> -> vector<32x64xf32>
    %30 = arith.addf %24, %29 : vector<32x64xf32>
    %c0_32 = arith.constant 0 : index
    %c0_33 = arith.constant 0 : index
    %31 = vector.load %arg6[%c0_32, %c0_33] : memref<1x64xf32, #tpu.memory_space<vmem>>, vector<1x64xf32>
    %32 = vector.broadcast %31 : vector<1x64xf32> to vector<32x64xf32>
    %33 = arith.addf %30, %32 : vector<32x64xf32>
    %c0_34 = arith.constant 0 : index
    %c0_35 = arith.constant 0 : index
    %c0_36 = arith.constant 0 : index
    %34 = vector.load %arg2[%c0_34, %c0_35, %c0_36] : memref<2x16x64xf32, #tpu.memory_space<vmem>>, vector<2x16x64xf32>
    %35 = vector.shape_cast %34 : vector<2x16x64xf32> to vector<32x64xf32>
    %36 = arith.addf %33, %35 : vector<32x64xf32>
    %cst_37 = arith.constant 0.000000e+00 : f32
    %37 = vector.broadcast %cst_37 : f32 to vector<32x64xf32>
    %38 = arith.maximumf %36, %37 : vector<32x64xf32>
    %39 = vector.shape_cast %38 : vector<32x64xf32> to vector<2x16x64xf32>
    %c0_38 = arith.constant 0 : index
    %c0_39 = arith.constant 0 : index
    %c0_40 = arith.constant 0 : index
    %40 = vector.load %arg7[%c0_38, %c0_39, %c0_40] : memref<2x16x64xf32, #tpu.memory_space<vmem>>, vector<2x16x64xf32>
    tpu.vector_store %arg7[%c0_38, %c0_39, %c0_40], %39 {strides = array<i32>} : memref<2x16x64xf32, #tpu.memory_space<vmem>>, vector<2x16x64xf32>,
    return
  }
  func.func @transform_0(%arg0: i32) -> (i32, i32, i32) {
    %c0_i32 = arith.constant 0 : i32
    %c0_i32_0 = arith.constant 0 : i32
    %c0_i32_1 = arith.constant 0 : i32
    %c0_i32_2 = arith.constant 0 : i32
    return %c0_i32, %c0_i32_0, %c0_i32_1 : i32, i32, i32
  }
  func.func @transform_1(%arg0: i32) -> (i32, i32, i32) {
    %c0_i32 = arith.constant 0 : i32
    %c0_i32_0 = arith.constant 0 : i32
    %c0_i32_1 = arith.constant 0 : i32
    %c0_i32_2 = arith.constant 0 : i32
    return %c0_i32, %c0_i32_0, %c0_i32_1 : i32, i32, i32
  }
  func.func @transform_2(%arg0: i32) -> (i32, i32) {
    %c0_i32 = arith.constant 0 : i32
    %c0_i32_0 = arith.constant 0 : i32
    %c0_i32_1 = arith.constant 0 : i32
    return %c0_i32, %c0_i32_0 : i32, i32
  }
  func.func @transform_3(%arg0: i32) -> (i32, i32, i32) {
    %c0_i32 = arith.constant 0 : i32
    %c0_i32_0 = arith.constant 0 : i32
    %c0_i32_1 = arith.constant 0 : i32
    %c0_i32_2 = arith.constant 0 : i32
    return %c0_i32, %c0_i32_0, %c0_i32_1 : i32, i32, i32
  }
  func.func @transform_4(%arg0: i32) -> (i32, i32) {
    %c0_i32 = arith.constant 0 : i32
    %c0_i32_0 = arith.constant 0 : i32
    %c0_i32_1 = arith.constant 0 : i32
    return %c0_i32, %c0_i32_0 : i32, i32
  }
  func.func @transform_5(%arg0: i32) -> (i32, i32) {
    %c0_i32 = arith.constant 0 : i32
    %c0_i32_0 = arith.constant 0 : i32
    %c0_i32_1 = arith.constant 0 : i32
    return %c0_i32, %c0_i32_0 : i32, i32
  }
  func.func @transform_6(%arg0: i32) -> (i32, i32, i32) {
    %c0_i32 = arith.constant 0 : i32
    %c0_i32_0 = arith.constant 0 : i32
    %c0_i32_1 = arith.constant 0 : i32
    %c0_i32_2 = arith.constant 0 : i32
    return %c0_i32, %c0_i32_0, %c0_i32_1 : i32, i32, i32
  }
}

</mosaic_0001>

<llo_original>
// kernel: tpu_custom_call.1
$region0: #{tpu_custom_call.1}
  #allocation0 [shape = 'u32[]', space=smem, size = 0x4, offset = 0x4, fixed_abs, tag = 'smem constant byte address 0x4 - core index']
  #allocation1 [shape = 'u32[144,128]{1,0:T(1,128)}', space=vmem, size = 0x12000, scoped, tag = 'internal scratch']
  #allocation2 [shape = 'f32[2,25,64]{2,1,0:T(8,128)}', space=vmem, size = 0x8000, scoped, tag = 'scratch operand']
  %s0 = inlined_call_operand.vmem [shape: f32[2,16,192], index: 0, kind: input, shape index: {}]
  %s1 = inlined_call_operand.vmem [shape: f32[2,16,64], index: 1, kind: input, shape index: {}]
  %s2 = inlined_call_operand.vmem [shape: f32[192,64], index: 2, kind: input, shape index: {}]
  %s3 = inlined_call_operand.vmem [shape: f32[3,64,64], index: 3, kind: input, shape index: {}]
  %s4 = inlined_call_operand.vmem [shape: f32[1,64], index: 4, kind: input, shape index: {}]
  %s5 = inlined_call_operand.vmem [shape: f32[1,64], index: 5, kind: input, shape index: {}]
  %s6 = inlined_call_operand.hbm [shape: f32[2,16,64], index: 6, kind: output, shape index: {}]
  %s7 = sld [smem:[#allocation0]]
  $region34: #{tpu_custom_call.1} parent=0
    _
  %s9 = ssub.s32 1, %s7
  %s10 = scalar_select 0, %s9, %s7
  $region1: #{tpu_custom_call.1} parent=0
    #allocation3 [shape = 'u8[16384]{0}', space=vmem, size = 0x4000, scoped, tag = 'output window, operand 0, single buffered']
    #allocation4 [shape = 's32[1]{0}', space=sflag, size = 0x4, scoped, tag = 'scoped memory for tpu_custom_call.1']
    %11 = vsyncpa [#allocation4], 0
    // Predicated region
    $region2: #{tpu_custom_call.1} parent=1 // pred_check
      _
    $region3: #{tpu_custom_call.1} parent=1 // pred_check_branch
      %13 = sbr.rel (0) target = $region5
    $region4: #{tpu_custom_call.1} parent=1 // pred_region
      _
    $region5: #{tpu_custom_call.1} parent=1 // pred_fallthru
      _
    // Predicated region
    $region6: #{tpu_custom_call.1} parent=1 // pred_check
      _
    $region7: #{tpu_custom_call.1} parent=1 // pred_check_branch
      %15 = sbr.rel (0) target = $region9
    $region8: #{tpu_custom_call.1} parent=1 // pred_region
      _
    $region9: #{tpu_custom_call.1} parent=1 // pred_fallthru
      _
    // Predicated region
    $region10: #{tpu_custom_call.1} parent=1 // pred_check
      _
    $region11: #{tpu_custom_call.1} parent=1 // pred_check_branch
      %17 = sbr.rel (0) target = $region13
    $region12: #{tpu_custom_call.1} parent=1 // pred_region
      _
    $region13: #{tpu_custom_call.1} parent=1 // pred_fallthru
      _
    // Predicated region
    $region14: #{tpu_custom_call.1} parent=1 // pred_check
      _
    $region15: #{tpu_custom_call.1} parent=1 // pred_check_branch
      %19 = sbr.rel (0) target = $region17
    $region16: #{tpu_custom_call.1} parent=1 // pred_region
      _
    $region17: #{tpu_custom_call.1} parent=1 // pred_fallthru
      _
    // Predicated region
    $region18: #{tpu_custom_call.1} parent=1 // pred_check
      _
    $region19: #{tpu_custom_call.1} parent=1 // pred_check_branch
      %21 = sbr.rel (0) target = $region21
    $region20: #{tpu_custom_call.1} parent=1 // pred_region
      _
    $region21: #{tpu_custom_call.1} parent=1 // pred_fallthru
      _
    // Predicated region
    $region22: #{tpu_custom_call.1} parent=1 // pred_check
      _
    $region23: #{tpu_custom_call.1} parent=1 // pred_check_branch
      %23 = sbr.rel (0) target = $region25
    $region24: #{tpu_custom_call.1} parent=1 // pred_region
      _
    $region25: #{tpu_custom_call.1} parent=1 // pred_fallthru
      _
    %v24 = vld [vmem:[%s0] sm:$0xff]
    %v25 = vld [vmem:[%s0 + $0x8] sm:$0xff]
    %v26 = vld [vmem:[%s0 + $0x10] sm:$0xff]
    %v27 = vld [vmem:[%s0 + $0x18] sm:$0xff]
    %v28 = vld [vmem:[%s0 + $0x20] sm:$0xff]
    %v29 = vld [vmem:[%s0 + $0x28] sm:$0xff]
    %v30 = vld [vmem:[%s0 + $0x30] sm:$0xff]
    %v31 = vld [vmem:[%s0 + $0x38] sm:$0xff]
    %v32 = vld [vmem:[%s2] sm:$0xff]
    %v33 = vld [vmem:[%s2 + $0x8] sm:$0xff]
    %v34 = vld [vmem:[%s2 + $0x10] sm:$0xff]
    %v35 = vld [vmem:[%s2 + $0x18] sm:$0xff]
    %v36 = vld [vmem:[%s2 + $0x20] sm:$0xff]
    %v37 = vld [vmem:[%s2 + $0x28] sm:$0xff]
    %v38 = vld [vmem:[%s2 + $0x30] sm:$0xff]
    %v39 = vld [vmem:[%s2 + $0x38] sm:$0xff]
    %v40 = vld [vmem:[%s2 + $0x40] sm:$0xff]
    %v41 = vld [vmem:[%s2 + $0x48] sm:$0xff]
    %v42 = vld [vmem:[%s2 + $0x50] sm:$0xff]
    %v43 = vld [vmem:[%s2 + $0x58] sm:$0xff]
    %v44 = vld [vmem:[%s2 + $0x60] sm:$0xff]
    %v45 = vld [vmem:[%s2 + $0x68] sm:$0xff]
    %v46 = vld [vmem:[%s2 + $0x70] sm:$0xff]
    %v47 = vld [vmem:[%s2 + $0x78] sm:$0xff]
    %v48 = vld [vmem:[%s2 + $0x80] sm:$0xff]
    %v49 = vld [vmem:[%s2 + $0x88] sm:$0xff]
    %v50 = vld [vmem:[%s2 + $0x90] sm:$0xff]
    %v51 = vld [vmem:[%s2 + $0x98] sm:$0xff]
    %v52 = vld [vmem:[%s2 + $0xa0] sm:$0xff]
    %v53 = vld [vmem:[%s2 + $0xa8] sm:$0xff]
    %v54 = vld [vmem:[%s2 + $0xb0] sm:$0xff]
    %v55 = vld [vmem:[%s2 + $0xb8] sm:$0xff]
    %v56 = vld [vmem:[%s4] sm:$0x1]
    %v58 = vlaneseq
    %v59 = vshrl.u32 %v58, 7
    %v60 = vsub.s32 0, %v59
    %v61 = vrot.slane %v56, %v60
    %vm63 = vcmask 523264
    %v65 = vsel %vm63, %v25, 0
    %v68 = vsel %vm63, %v27, 0
    %v71 = vsel %vm63, %v29, 0
    %v74 = vsel %vm63, %v31, 0
    %76 = vmatprep.subr.mxu0 0.0
    %77 = vmatpush1.msra.mxu0 %v47
    %78 = vmatprep.subr.mxu0 0.0
    %79 = vmatpush1.msra.mxu0 %v46
    %80 = vmatprep.subr.mxu0 0.0
    %81 = vmatpush1.msra.mxu0 %v45
    %82 = vmatprep.subr.mxu0 0.0
    %83 = vmatpush1.msra.mxu0 %v44
    %84 = vmatprep.subr.mxu0 0.0
    %85 = vmatpush1.msra.mxu0 %v43
    %86 = vmatprep.subr.mxu0 0.0
    %87 = vmatpush1.msra.mxu0 %v42
    %88 = vmatprep.subr.mxu0 0.0
    %89 = vmatpush1.msra.mxu0 %v41
    %90 = vmatprep.subr.mxu0 0.0
    %91 = vmatpush1.msra.mxu0 %v40
    %92 = vmatprep.subr.mxu0 0.0
    %93 = vmatpush1.msra.mxu0 %v39
    %94 = vmatprep.subr.mxu0 0.0
    %95 = vmatpush1.msra.mxu0 %v38
    %96 = vmatprep.subr.mxu0 0.0
    %97 = vmatpush1.msra.mxu0 %v37
    %98 = vmatprep.subr.mxu0 0.0
    %99 = vmatpush1.msra.mxu0 %v36
    %100 = vmatprep.subr.mxu0 0.0
    %101 = vmatpush1.msra.mxu0 %v35
    %102 = vmatprep.subr.mxu0 0.0
    %103 = vmatpush1.msra.mxu0 %v34
    %104 = vmatprep.subr.mxu0 0.0
    %105 = vmatpush1.msra.mxu0 %v33
    %106 = vmatprep.subr.mxu0 0.0
    %107 = vmatpush1.msra.mxu0 %v32
    %108 = vmatprep.subr.mxu0 0.0
    %109 = vmatpush2.msra.mxu0 0.0
    %110 = vmatprep.subr.mxu0 0.0
    %111 = vmatpush2.msra.mxu0 0.0
    %112 = vmatprep.subr.mxu0 0.0
    %113 = vmatpush2.msra.mxu0 0.0
    %114 = vmatprep.subr.mxu0 0.0
    %115 = vmatpush2.msra.mxu0 0.0
    %116 = vmatprep.subr.mxu0 0.0
    %117 = vmatpush2.msra.mxu0 0.0
    %118 = vmatprep.subr.mxu0 0.0
    %119 = vmatpush2.msra.mxu0 0.0
    %120 = vmatprep.subr.mxu0 0.0
    %121 = vmatpush2.msra.mxu0 0.0
    %122 = vmatprep.subr.mxu0 0.0
    %123 = vmatpush2.msra.mxu0 0.0
    %124 = vmatprep.subr.mxu0 0.0
    %125 = vmatpush2.msra.mxu0 %v55
    %126 = vmatprep.subr.mxu0 0.0
    %127 = vmatpush2.msra.mxu0 %v54
    %128 = vmatprep.subr.mxu0 0.0
    %129 = vmatpush2.msra.mxu0 %v53
    %130 = vmatprep.subr.mxu0 0.0
    %131 = vmatpush2.msra.mxu0 %v52
    %132 = vmatprep.subr.mxu0 0.0
    %133 = vmatpush2.msra.mxu0 %v51
    %134 = vmatprep.subr.mxu0 0.0
    %135 = vmatpush2.msra.mxu0 %v50
    %136 = vmatprep.subr.mxu0 0.0
    %137 = vmatpush2.msra.mxu0 %v49
    %138 = vmatprep.subr.mxu0 0.0
    %139 = vmatpush2.msra.mxu0 %v48
    %140 = vmatprep.mubr.f32.mxu0 %v65
    %141 = vmatmul.mubr.f32.gmra.mxu0 %v24
    %v142 = vpop.f32.mrf.mxu0
    %v143 = vadd.f32 %v61, %v142
    %v144 = vpop.f32.mrf.mxu0
    %145 = vmatprep.mubr.f32.mxu0 %v68
    %146 = vmatmul.mubr.f32.gmra.mxu0 %v26
    %v147 = vpop.f32.mrf.mxu0
    %v148 = vadd.f32 %v61, %v147
    %v149 = vpop.f32.mrf.mxu0
    %150 = vmatprep.mubr.f32.mxu0 %v71
    %151 = vmatmul.mubr.f32.gmra.mxu0 %v28
    %v152 = vpop.f32.mrf.mxu0
    %v153 = vadd.f32 %v61, %v152
    %v154 = vpop.f32.mrf.mxu0
    %155 = vmatprep.mubr.f32.mxu0 %v74
    %156 = vmatmul.mubr.f32.gmra.mxu0 %v30
    %v157 = vpop.f32.mrf.mxu0
    %v158 = vadd.f32 %v61, %v157
    %v159 = vpop.f32.mrf.mxu0
    %160 = vdwg.mxu0
    %v161 = vmax.f32 %v143, 0.0
    %v162 = vmax.f32 %v148, 0.0
    %v163 = vmax.f32 %v153, 0.0
    %v164 = vmax.f32 %v158, 0.0
    %vm165 = vcmask 516096
    %166 = vst.msk [vmem:[#allocation2 + $0x7] sm:$0x1] %vm165, 0.0
    %167 = vst.msk [vmem:[#allocation2 + $0x27] sm:$0x1] %vm165, 0.0
    %168 = vst.msk [vmem:[#allocation2 + $0x18] sm:$0x1] %vm165, 0.0
    %169 = vst.msk [vmem:[#allocation2 + $0x38] sm:$0x1] %vm165, 0.0
    %170 = vst.msk [vmem:[#allocation2 + $0x8] sm:$0xff] %vm63, %v161
    %171 = vst.msk [vmem:[#allocation2 + $0x10] sm:$0xff] %vm63, %v162
    %172 = vst.msk [vmem:[#allocation2 + $0x28] sm:$0xff] %vm63, %v163
    %173 = vst.msk [vmem:[#allocation2 + $0x30] sm:$0xff] %vm63, %v164
    %v174 = vld [vmem:[#allocation2 + $0x7] sm:$0xff]
    %v175 = vld [vmem:[#allocation2 + $0xf] sm:$0xff]
    %v176 = vld [vmem:[#allocation2 + $0x27] sm:$0xff]
    %v177 = vld [vmem:[#allocation2 + $0x2f] sm:$0xff]
    %v178 = vld [vmem:[%s3] sm:$0xff]
    %v179 = vld [vmem:[%s3 + $0x8] sm:$0xff]
    %v180 = vld [vmem:[%s3 + $0x10] sm:$0xff]
    %v181 = vld [vmem:[%s3 + $0x18] sm:$0xff]
    %v182 = vld [vmem:[%s3 + $0x20] sm:$0xff]
    %v183 = vld [vmem:[%s3 + $0x28] sm:$0xff]
    %v184 = vld [vmem:[%s3 + $0x30] sm:$0xff]
    %v185 = vld [vmem:[%s3 + $0x38] sm:$0xff]
    %v186 = vld [vmem:[#allocation2 + $0x8] sm:$0xff]
    %v187 = vld [vmem:[#allocation2 + $0x10] sm:$0xff]
    %v188 = vld [vmem:[#allocation2 + $0x28] sm:$0xff]
    %v189 = vld [vmem:[#allocation2 + $0x30] sm:$0xff]
    %s190 = scalar_lea.vmem %s3, 64
    %v191 = vld [vmem:[%s190] sm:$0xff]
    %v192 = vld [vmem:[%s190 + $0x8] sm:$0xff]
    %v193 = vld [vmem:[%s190 + $0x10] sm:$0xff]
    %v194 = vld [vmem:[%s190 + $0x18] sm:$0xff]
    %v195 = vld [vmem:[%s190 + $0x20] sm:$0xff]
    %v196 = vld [vmem:[%s190 + $0x28] sm:$0xff]
    %v197 = vld [vmem:[%s190 + $0x30] sm:$0xff]
    %v198 = vld [vmem:[%s190 + $0x38] sm:$0xff]
    %v200 = vsel %vm63, %v186, 0
    %v203 = vsel %vm63, %v187, 0
    %v206 = vsel %vm63, %v188, 0
    %v209 = vsel %vm63, %v189, 0
    %211 = vmatprep.subr.mxu0 0.0
    %212 = vmatpush1.msra.mxu0 0.0
    %213 = vmatprep.subr.mxu0 0.0
    %214 = vmatpush1.msra.mxu0 0.0
    %215 = vmatprep.subr.mxu0 0.0
    %216 = vmatpush1.msra.mxu0 0.0
    %217 = vmatprep.subr.mxu0 0.0
    %218 = vmatpush1.msra.mxu0 0.0
    %219 = vmatprep.subr.mxu0 0.0
    %220 = vmatpush1.msra.mxu0 0.0
    %221 = vmatprep.subr.mxu0 0.0
    %222 = vmatpush1.msra.mxu0 0.0
    %223 = vmatprep.subr.mxu0 0.0
    %224 = vmatpush1.msra.mxu0 0.0
    %225 = vmatprep.subr.mxu0 0.0
    %226 = vmatpush1.msra.mxu0 0.0
    %227 = vmatprep.subr.mxu0 0.0
    %228 = vmatpush1.msra.mxu0 %v198
    %229 = vmatprep.subr.mxu0 0.0
    %230 = vmatpush1.msra.mxu0 %v197
    %231 = vmatprep.subr.mxu0 0.0
    %232 = vmatpush1.msra.mxu0 %v196
    %233 = vmatprep.subr.mxu0 0.0
    %234 = vmatpush1.msra.mxu0 %v195
    %235 = vmatprep.subr.mxu0 0.0
    %236 = vmatpush1.msra.mxu0 %v194
    %237 = vmatprep.subr.mxu0 0.0
    %238 = vmatpush1.msra.mxu0 %v193
    %239 = vmatprep.subr.mxu0 0.0
    %240 = vmatpush1.msra.mxu0 %v192
    %241 = vmatprep.subr.mxu0 0.0
    %242 = vmatpush1.msra.mxu0 %v191
    %243 = vmatprep.subr.mxu0 0.0
    %244 = vmatpush2.msra.mxu0 0.0
    %245 = vmatprep.subr.mxu0 0.0
    %246 = vmatpush2.msra.mxu0 0.0
    %247 = vmatprep.subr.mxu0 0.0
    %248 = vmatpush2.msra.mxu0 0.0
    %249 = vmatprep.subr.mxu0 0.0
    %250 = vmatpush2.msra.mxu0 0.0
    %251 = vmatprep.subr.mxu0 0.0
    %252 = vmatpush2.msra.mxu0 0.0
    %253 = vmatprep.subr.mxu0 0.0
    %254 = vmatpush2.msra.mxu0 0.0
    %255 = vmatprep.subr.mxu0 0.0
    %256 = vmatpush2.msra.mxu0 0.0
    %257 = vmatprep.subr.mxu0 0.0
    %258 = vmatpush2.msra.mxu0 0.0
    %259 = vmatprep.subr.mxu0 0.0
    %260 = vmatpush2.msra.mxu0 0.0
    %261 = vmatprep.subr.mxu0 0.0
    %262 = vmatpush2.msra.mxu0 0.0
    %263 = vmatprep.subr.mxu0 0.0
    %264 = vmatpush2.msra.mxu0 0.0
    %265 = vmatprep.subr.mxu0 0.0
    %266 = vmatpush2.msra.mxu0 0.0
    %267 = vmatprep.subr.mxu0 0.0
    %268 = vmatpush2.msra.mxu0 0.0
    %269 = vmatprep.subr.mxu0 0.0
    %270 = vmatpush2.msra.mxu0 0.0
    %271 = vmatprep.subr.mxu0 0.0
    %272 = vmatpush2.msra.mxu0 0.0
    %273 = vmatprep.subr.mxu0 0.0
    %274 = vmatpush2.msra.mxu0 0.0
    %275 = vmatprep.mubr.f32.mxu0 0.0
    %276 = vmatmul.mubr.f32.gmra.mxu0 %v200
    %v277 = vpop.f32.mrf.mxu0
    %v278 = vadd.f32 0.0, %v277
    %v279 = vpop.f32.mrf.mxu0
    %280 = vmatprep.mubr.f32.mxu0 0.0
    %281 = vmatmul.mubr.f32.gmra.mxu0 %v203
    %v282 = vpop.f32.mrf.mxu0
    %v283 = vadd.f32 0.0, %v282
    %v284 = vpop.f32.mrf.mxu0
    %285 = vmatprep.mubr.f32.mxu0 0.0
    %286 = vmatmul.mubr.f32.gmra.mxu0 %v206
    %v287 = vpop.f32.mrf.mxu0
    %v288 = vadd.f32 0.0, %v287
    %v289 = vpop.f32.mrf.mxu0
    %290 = vmatprep.mubr.f32.mxu0 0.0
    %291 = vmatmul.mubr.f32.gmra.mxu0 %v209
    %v292 = vpop.f32.mrf.mxu0
    %v293 = vadd.f32 0.0, %v292
    %v294 = vpop.f32.mrf.mxu0
    %295 = vdwg.mxu0
    %v297 = vsel %vm63, %v174, 0
    %v300 = vsel %vm63, %v175, 0
    %v303 = vsel %vm63, %v176, 0
    %v306 = vsel %vm63, %v177, 0
    %308 = vmatprep.subr.mxu0 0.0
    %309 = vmatpush1.msra.mxu0 0.0
    %310 = vmatprep.subr.mxu0 0.0
    %311 = vmatpush1.msra.mxu0 0.0
    %312 = vmatprep.subr.mxu0 0.0
    %313 = vmatpush1.msra.mxu0 0.0
    %314 = vmatprep.subr.mxu0 0.0
    %315 = vmatpush1.msra.mxu0 0.0
    %316 = vmatprep.subr.mxu0 0.0
    %317 = vmatpush1.msra.mxu0 0.0
    %318 = vmatprep.subr.mxu0 0.0
    %319 = vmatpush1.msra.mxu0 0.0
    %320 = vmatprep.subr.mxu0 0.0
    %321 = vmatpush1.msra.mxu0 0.0
    %322 = vmatprep.subr.mxu0 0.0
    %323 = vmatpush1.msra.mxu0 0.0
    %324 = vmatprep.subr.mxu0 0.0
    %325 = vmatpush1.msra.mxu0 %v185
    %326 = vmatprep.subr.mxu0 0.0
    %327 = vmatpush1.msra.mxu0 %v184
    %328 = vmatprep.subr.mxu0 0.0
    %329 = vmatpush1.msra.mxu0 %v183
    %330 = vmatprep.subr.mxu0 0.0
    %331 = vmatpush1.msra.mxu0 %v182
    %332 = vmatprep.subr.mxu0 0.0
    %333 = vmatpush1.msra.mxu0 %v181
    %334 = vmatprep.subr.mxu0 0.0
    %335 = vmatpush1.msra.mxu0 %v180
    %336 = vmatprep.subr.mxu0 0.0
    %337 = vmatpush1.msra.mxu0 %v179
    %338 = vmatprep.subr.mxu0 0.0
    %339 = vmatpush1.msra.mxu0 %v178
    %340 = vmatprep.subr.mxu0 0.0
    %341 = vmatpush2.msra.mxu0 0.0
    %342 = vmatprep.subr.mxu0 0.0
    %343 = vmatpush2.msra.mxu0 0.0
    %344 = vmatprep.subr.mxu0 0.0
    %345 = vmatpush2.msra.mxu0 0.0
    %346 = vmatprep.subr.mxu0 0.0
    %347 = vmatpush2.msra.mxu0 0.0
    %348 = vmatprep.subr.mxu0 0.0
    %349 = vmatpush2.msra.mxu0 0.0
    %350 = vmatprep.subr.mxu0 0.0
    %351 = vmatpush2.msra.mxu0 0.0
    %352 = vmatprep.subr.mxu0 0.0
    %353 = vmatpush2.msra.mxu0 0.0
    %354 = vmatprep.subr.mxu0 0.0
    %355 = vmatpush2.msra.mxu0 0.0
    %356 = vmatprep.subr.mxu0 0.0
    %357 = vmatpush2.msra.mxu0 0.0
    %358 = vmatprep.subr.mxu0 0.0
    %359 = vmatpush2.msra.mxu0 0.0
    %360 = vmatprep.subr.mxu0 0.0
    %361 = vmatpush2.msra.mxu0 0.0
    %362 = vmatprep.subr.mxu0 0.0
    %363 = vmatpush2.msra.mxu0 0.0
    %364 = vmatprep.subr.mxu0 0.0
    %365 = vmatpush2.msra.mxu0 0.0
    %366 = vmatprep.subr.mxu0 0.0
    %367 = vmatpush2.msra.mxu0 0.0
    %368 = vmatprep.subr.mxu0 0.0
    %369 = vmatpush2.msra.mxu0 0.0
    %370 = vmatprep.subr.mxu0 0.0
    %371 = vmatpush2.msra.mxu0 0.0
    %372 = vmatprep.mubr.f32.mxu0 0.0
    %373 = vmatmul.mubr.f32.gmra.mxu0 %v297
    %v374 = vpop.f32.mrf.mxu0
    %v375 = vadd.f32 %v278, %v374
    %v376 = vpop.f32.mrf.mxu0
    %377 = vmatprep.mubr.f32.mxu0 0.0
    %378 = vmatmul.mubr.f32.gmra.mxu0 %v300
    %v379 = vpop.f32.mrf.mxu0
    %v380 = vadd.f32 %v283, %v379
    %v381 = vpop.f32.mrf.mxu0
    %382 = vmatprep.mubr.f32.mxu0 0.0
    %383 = vmatmul.mubr.f32.gmra.mxu0 %v303
    %v384 = vpop.f32.mrf.mxu0
    %v385 = vadd.f32 %v288, %v384
    %v386 = vpop.f32.mrf.mxu0
    %387 = vmatprep.mubr.f32.mxu0 0.0
    %388 = vmatmul.mubr.f32.gmra.mxu0 %v306
    %v389 = vpop.f32.mrf.mxu0
    %v390 = vadd.f32 %v293, %v389
    %v391 = vpop.f32.mrf.mxu0
    %392 = vdwg.mxu0
    %v393 = vld [vmem:[#allocation2 + $0x9] sm:$0xff]
    %v394 = vld [vmem:[#allocation2 + $0x11] sm:$0xff]
    %v395 = vld [vmem:[#allocation2 + $0x29] sm:$0xff]
    %v396 = vld [vmem:[#allocation2 + $0x31] sm:$0xff]
    %s397 = scalar_lea.vmem %s3, 128
    %v398 = vld [vmem:[%s397] sm:$0xff]
    %v399 = vld [vmem:[%s397 + $0x8] sm:$0xff]
    %v400 = vld [vmem:[%s397 + $0x10] sm:$0xff]
    %v401 = vld [vmem:[%s397 + $0x18] sm:$0xff]
    %v402 = vld [vmem:[%s397 + $0x20] sm:$0xff]
    %v403 = vld [vmem:[%s397 + $0x28] sm:$0xff]
    %v404 = vld [vmem:[%s397 + $0x30] sm:$0xff]
    %v405 = vld [vmem:[%s397 + $0x38] sm:$0xff]
    %v407 = vsel %vm63, %v393, 0
    %v410 = vsel %vm63, %v394, 0
    %v413 = vsel %vm63, %v395, 0
    %v416 = vsel %vm63, %v396, 0
    %418 = vmatprep.subr.mxu0 0.0
    %419 = vmatpush1.msra.mxu0 0.0
    %420 = vmatprep.subr.mxu0 0.0
    %421 = vmatpush1.msra.mxu0 0.0
    %422 = vmatprep.subr.mxu0 0.0
    %423 = vmatpush1.msra.mxu0 0.0
    %424 = vmatprep.subr.mxu0 0.0
    %425 = vmatpush1.msra.mxu0 0.0
    %426 = vmatprep.subr.mxu0 0.0
    %427 = vmatpush1.msra.mxu0 0.0
    %428 = vmatprep.subr.mxu0 0.0
    %429 = vmatpush1.msra.mxu0 0.0
    %430 = vmatprep.subr.mxu0 0.0
    %431 = vmatpush1.msra.mxu0 0.0
    %432 = vmatprep.subr.mxu0 0.0
    %433 = vmatpush1.msra.mxu0 0.0
    %434 = vmatprep.subr.mxu0 0.0
    %435 = vmatpush1.msra.mxu0 %v405
    %436 = vmatprep.subr.mxu0 0.0
    %437 = vmatpush1.msra.mxu0 %v404
    %438 = vmatprep.subr.mxu0 0.0
    %439 = vmatpush1.msra.mxu0 %v403
    %440 = vmatprep.subr.mxu0 0.0
    %441 = vmatpush1.msra.mxu0 %v402
    %442 = vmatprep.subr.mxu0 0.0
    %443 = vmatpush1.msra.mxu0 %v401
    %444 = vmatprep.subr.mxu0 0.0
    %445 = vmatpush1.msra.mxu0 %v400
    %446 = vmatprep.subr.mxu0 0.0
    %447 = vmatpush1.msra.mxu0 %v399
    %448 = vmatprep.subr.mxu0 0.0
    %449 = vmatpush1.msra.mxu0 %v398
    %450 = vmatprep.subr.mxu0 0.0
    %451 = vmatpush2.msra.mxu0 0.0
    %452 = vmatprep.subr.mxu0 0.0
    %453 = vmatpush2.msra.mxu0 0.0
    %454 = vmatprep.subr.mxu0 0.0
    %455 = vmatpush2.msra.mxu0 0.0
    %456 = vmatprep.subr.mxu0 0.0
    %457 = vmatpush2.msra.mxu0 0.0
    %458 = vmatprep.subr.mxu0 0.0
    %459 = vmatpush2.msra.mxu0 0.0
    %460 = vmatprep.subr.mxu0 0.0
    %461 = vmatpush2.msra.mxu0 0.0
    %462 = vmatprep.subr.mxu0 0.0
    %463 = vmatpush2.msra.mxu0 0.0
    %464 = vmatprep.subr.mxu0 0.0
    %465 = vmatpush2.msra.mxu0 0.0
    %466 = vmatprep.subr.mxu0 0.0
    %467 = vmatpush2.msra.mxu0 0.0
    %468 = vmatprep.subr.mxu0 0.0
    %469 = vmatpush2.msra.mxu0 0.0
    %470 = vmatprep.subr.mxu0 0.0
    %471 = vmatpush2.msra.mxu0 0.0
    %472 = vmatprep.subr.mxu0 0.0
    %473 = vmatpush2.msra.mxu0 0.0
    %474 = vmatprep.subr.mxu0 0.0
    %475 = vmatpush2.msra.mxu0 0.0
    %476 = vmatprep.subr.mxu0 0.0
    %477 = vmatpush2.msra.mxu0 0.0
    %478 = vmatprep.subr.mxu0 0.0
    %479 = vmatpush2.msra.mxu0 0.0
    %480 = vmatprep.subr.mxu0 0.0
    %481 = vmatpush2.msra.mxu0 0.0
    %482 = vmatprep.mubr.f32.mxu0 0.0
    %483 = vmatmul.mubr.f32.gmra.mxu0 %v407
    %v484 = vpop.f32.mrf.mxu0
    %v485 = vadd.f32 0.0, %v484
    %v486 = vpop.f32.mrf.mxu0
    %487 = vmatprep.mubr.f32.mxu0 0.0
    %488 = vmatmul.mubr.f32.gmra.mxu0 %v410
    %v489 = vpop.f32.mrf.mxu0
    %v490 = vadd.f32 0.0, %v489
    %v491 = vpop.f32.mrf.mxu0
    %492 = vmatprep.mubr.f32.mxu0 0.0
    %493 = vmatmul.mubr.f32.gmra.mxu0 %v413
    %v494 = vpop.f32.mrf.mxu0
    %v495 = vadd.f32 0.0, %v494
    %v496 = vpop.f32.mrf.mxu0
    %497 = vmatprep.mubr.f32.mxu0 0.0
    %498 = vmatmul.mubr.f32.gmra.mxu0 %v416
    %v499 = vpop.f32.mrf.mxu0
    %v500 = vadd.f32 0.0, %v499
    %v501 = vpop.f32.mrf.mxu0
    %502 = vdwg.mxu0
    %v503 = vadd.f32 %v375, %v485
    %v504 = vadd.f32 %v380, %v490
    %v505 = vadd.f32 %v385, %v495
    %v506 = vadd.f32 %v390, %v500
    %v507 = vld [vmem:[%s5] sm:$0x1]
    %v509 = vlaneseq
    %v510 = vshrl.u32 %v509, 7
    %v511 = vsub.s32 0, %v510
    %v512 = vrot.slane %v507, %v511
    %v514 = vadd.f32 %v503, %v512
    %v515 = vadd.f32 %v504, %v512
    %v516 = vadd.f32 %v505, %v512
    %v517 = vadd.f32 %v506, %v512
    %v518 = vld [vmem:[%s1] sm:$0xff]
    %v519 = vld [vmem:[%s1 + $0x8] sm:$0xff]
    %v520 = vld [vmem:[%s1 + $0x10] sm:$0xff]
    %v521 = vld [vmem:[%s1 + $0x18] sm:$0xff]
    %v522 = vadd.f32 %v514, %v518
    %v523 = vadd.f32 %v515, %v519
    %v524 = vadd.f32 %v516, %v520
    %v525 = vadd.f32 %v517, %v521
    %v526 = vmax.f32 %v522, 0.0
    %v527 = vmax.f32 %v523, 0.0
    %v528 = vmax.f32 %v524, 0.0
    %v529 = vmax.f32 %v525, 0.0
    %530 = vst.msk [vmem:[#allocation3] sm:$0xff] %vm63, %v526
    %531 = vst.msk [vmem:[#allocation3 + $0x8] sm:$0xff] %vm63, %v527
    %532 = vst.msk [vmem:[#allocation3 + $0x10] sm:$0xff] %vm63, %v528
    %533 = vst.msk [vmem:[#allocation3 + $0x18] sm:$0xff] %vm63, %v529
    // Predicated region
    $region26: #{tpu_custom_call.1} parent=1 // pred_check
      _
    $region27: #{tpu_custom_call.1} parent=1 // pred_check_branch
      %535 = sbr.rel (0) target = $region29
    $region28: #{tpu_custom_call.1} parent=1 // pred_region
      %s537 = ssub.s32 512, 512
      %538 = vsyncadd [#allocation4], %s537
      %s539 = sshll.u32 [#allocation3], 4
      %s540 = int_to_ptr.vmem [resolvable:$true] %s539
      %545 = dma.vmem_to_hbm [thread:$0]  %s540, 512, %s6, [#allocation4], 128, 128, 8
    $region29: #{tpu_custom_call.1} parent=1 // pred_fallthru
      _
    // Predicated region
    $region30: #{tpu_custom_call.1} parent=1 // pred_check
      _
    $region31: #{tpu_custom_call.1} parent=1 // pred_check_branch
      %547 = sbr.rel (0) target = $region33
    $region32: #{tpu_custom_call.1} parent=1 // pred_region
      %548 = dma.done [#allocation4], 512
    $region33: #{tpu_custom_call.1} parent=1 // pred_fallthru
      _
    %549 = vsyncpa [#allocation4], 1

</llo_original>
